<compile_context>
chip_gen: v7x
topology: tpu7x:2x2x1
jax: 0.10.0
libtpu: 0.0.40
codegen_flags: <defaults>
</compile_context>

<pallas_src>
import functools

import jax
import jax.numpy as jnp
from jax.experimental import pallas as pl
from jax.experimental.pallas import tpu as pltpu


BLOCK_B = 128  # batch columns (lanes) per grid step; multiple of 128


def cnn_kernel(x_ref, a_ref, w1_ref, b1_ref, w2_ref, b2_ref, out_ref):
    xT = x_ref[...]                                               # (28, Bt)

    # Conv1d(k=2, stride=2) + flatten, for the even and odd conv positions of
    # each maxpool window, as ONE stacked MXU matmul (bias hoisted out).
    conv = jnp.dot(a_ref[...], xT,
                   preferred_element_type=jnp.float32)            # (448, Bt)

    # MaxPool1d(k=2): rows [0,224) hold the even positions, [224,448) the odd
    # ones (sublane-aligned static split -> no relayout), both already in
    # PyTorch flatten order (c*7 + l) along the row axis.
    pooled = jnp.maximum(conv[:224, :], conv[224:, :])            # (224, Bt)

    # Linear(224 -> 50) as one K=224 contraction, then ReLU (conv bias already
    # folded into b1_eff).
    h = jnp.dot(w1_ref[...], pooled,
                preferred_element_type=jnp.float32)               # (50, Bt)
    h = jnp.maximum(h + b1_ref[...], 0.0)

    # Linear(50 -> 1) as a sublane reduction (no 1-wide MXU matmul); output is
    # a lane-dense (1, Bt) slab.
    out_ref[...] = (jnp.sum(h * w2_ref[...], axis=0, keepdims=True)
                    + b2_ref[...])                                # (1, Bt)


def precompute_params(params):
    """One-time parameter re-layout (kept out of the per-call path)."""
    conv_w, conv_b, lin1_w, lin1_b, lin2_w, lin2_b = params
    w = conv_w.reshape(32, 2).astype(jnp.float32)                 # (chan, tap)

    # A[i, c*7 + l]: structured conv+flatten matrices.
    #   A_even picks taps x[4l],   x[4l+1]  (conv position 2l)
    #   A_odd  picks taps x[4l+2], x[4l+3]  (conv position 2l+1)
    i_idx = jnp.arange(28)[:, None, None]                         # (28, 1, 1)
    l_idx = jnp.arange(7)[None, None, :]                          # (1, 1, 7)
    w0 = w[None, :, 0:1]                                          # (1, 32, 1)
    w1t = w[None, :, 1:2]                                         # (1, 32, 1)
    a_even = (jnp.where(i_idx == 4 * l_idx, w0, 0.0)
              + jnp.where(i_idx == 4 * l_idx + 1, w1t, 0.0)).reshape(28, 224)
    a_odd = (jnp.where(i_idx == 4 * l_idx + 2, w0, 0.0)
             + jnp.where(i_idx == 4 * l_idx + 3, w1t, 0.0)).reshape(28, 224)
    # Batch-in-lanes orientation: stack the transposed matrices -> (448, 28).
    a_stacked = jnp.concatenate([a_even.T, a_odd.T], axis=0)

    # Linear1 weight used as-is: (50, 224), columns in flatten order (c*7+l).
    w1_mat = lin1_w.astype(jnp.float32)
    # Conv bias hoisted past max-pool and folded into linear1's bias.
    bc_flat = jnp.repeat(conv_b.astype(jnp.float32), 7)           # (224,)
    b1_eff = (lin1_b.astype(jnp.float32)
              + jnp.dot(w1_mat, bc_flat, precision="highest")).reshape(50, 1)

    w2_col = lin2_w.reshape(50, 1).astype(jnp.float32)
    b2 = lin2_b.reshape(1, 1).astype(jnp.float32)
    return (a_stacked, w1_mat, b1_eff, w2_col, b2)


@functools.partial(jax.jit, static_argnames=("block_b",))
def cnn_forward(x, prepped, block_b=BLOCK_B):
    """x: (B, 1, 28) float32 batch of independent windows (or a single (1,28)).
    Returns (B, 1): row b equals PyTorch CNNModel.forward on window b."""
    a_stacked, w1_mat, b1_eff, w2_col, b2 = prepped
    xs = x.reshape(-1, 28).astype(jnp.float32)
    b_in = xs.shape[0]
    b_pad = pl.cdiv(b_in, block_b) * block_b

    xT = xs.T                                                     # (28, B)
    if b_pad != b_in:
        xT = jnp.pad(xT, ((0, 0), (0, b_pad - b_in)))

    out = pl.pallas_call(
        cnn_kernel,
        out_shape=jax.ShapeDtypeStruct((1, b_pad), jnp.float32),
        grid_spec=pltpu.PrefetchScalarGridSpec(
            num_scalar_prefetch=0,
            grid=(b_pad // block_b,),
            in_specs=[
                pl.BlockSpec((28, block_b), lambda i: (0, i)),    # x tile
                pl.BlockSpec((448, 28), lambda i: (0, 0)),        # A stacked
                pl.BlockSpec((50, 224), lambda i: (0, 0)),        # W1
                pl.BlockSpec((50, 1), lambda i: (0, 0)),          # b1_eff
                pl.BlockSpec((50, 1), lambda i: (0, 0)),          # w2 col
                pl.BlockSpec((1, 1), lambda i: (0, 0)),           # b2
            ],
            out_specs=pl.BlockSpec((1, block_b), lambda i: (0, i)),
        ),
        compiler_params=pltpu.CompilerParams(
            dimension_semantics=("parallel",)),
    )(xT, a_stacked, w1_mat, b1_eff, w2_col, b2)
    return out[0, :b_in].reshape(b_in, 1)


def reference_forward(x, params):
    """Pure-JAX replica of the PyTorch forward for ONE window, for checking."""
    conv_w, conv_b, lin1_w, lin1_b, lin2_w, lin2_b = params
    xs = x.reshape(28)
    windows = jnp.stack([xs[0:27:2], xs[1:28:2]], axis=-1)            # (14, 2)
    conv = jnp.dot(windows, conv_w.reshape(32, 2).T,
                   precision="highest") + conv_b                      # (14, 32)
    conv = conv.T                                                     # (32, 14)
    pool = jnp.maximum(conv[:, 0:14:2], conv[:, 1:14:2])              # (32, 7)
    flat = pool.reshape(-1)                                           # (224,)
    h = jnp.maximum(jnp.dot(flat, lin1_w.T, precision="highest")
                    + lin1_b, 0.0)                                    # (50,)
    out = jnp.dot(h, lin2_w.T, precision="highest") + lin2_b          # (1,)
    return out


def init_params(key):
    k = jax.random.split(key, 6)
    conv_w = jax.random.normal(k[0], (32, 1, 2), jnp.float32) * 0.1
    conv_b = jax.random.normal(k[1], (32,), jnp.float32) * 0.1
    lin1_w = jax.random.normal(k[2], (50, 224), jnp.float32) * 0.05
    lin1_b = jax.random.normal(k[3], (50,), jnp.float32) * 0.05
    lin2_w = jax.random.normal(k[4], (1, 50), jnp.float32) * 0.05
    lin2_b = jax.random.normal(k[5], (1,), jnp.float32) * 0.05
    return (conv_w, conv_b, lin1_w, lin1_b, lin2_w, lin2_b)


# TODO(synk): the training-side pieces of the module (MSELoss, Adam, backward)
#             are out of scope for this forward-pass kernel.

if __name__ == "__main__":
    key = jax.random.PRNGKey(0)
    pkey, xkey = jax.random.split(key)
    params = init_params(pkey)
    prepped = precompute_params(params)            # one-time layout prep

    # 200 independent 28-step windows (exercises the batch-padding path);
    # each row is one PyTorch forward call.
    B = 200
    x = jax.random.normal(xkey, (B, 1, 28), jnp.float32)

    out = cnn_forward(x, prepped)
    out = jax.block_until_ready(out)

    ref = jax.vmap(lambda xi: reference_forward(xi, params))(x)   # (B, 1)
    assert out.shape == (B, 1)
    assert jnp.allclose(out, ref, atol=2e-4, rtol=2e-4), (
        float(jnp.max(jnp.abs(out - ref))))

    print("KERNEL_OK")
</pallas_src>

<mosaic_0001>
module attributes {stable_mosaic.version = 11 : i64} {
  func.func @cnn_kernel(%arg0: i32, %arg1: memref<28x128xf32, #tpu.memory_space<vmem>>, %arg2: memref<448x28xf32, #tpu.memory_space<vmem>>, %arg3: memref<50x224xf32, #tpu.memory_space<vmem>>, %arg4: memref<50x1xf32, #tpu.memory_space<vmem>>, %arg5: memref<50x1xf32, #tpu.memory_space<vmem>>, %arg6: memref<1x1xf32, #tpu.memory_space<vmem>>, %arg7: memref<1x128xf32, #tpu.memory_space<vmem>>) attributes {dimension_semantics = [#tpu.dimension_semantics<parallel>], iteration_bounds = array<i64: 2>, scalar_prefetch = 0 : i64, scratch_operands = 0 : i64, tpu.core_type = #tpu.core_type<tc>, window_params = [{transform_indices = @transform_0, window_bounds = array<i64: 28, 128>}, {pipeline_mode = #tpu.pipeline_mode<synchronous>, transform_indices = @transform_1, window_bounds = array<i64: 448, 28>}, {pipeline_mode = #tpu.pipeline_mode<synchronous>, transform_indices = @transform_2, window_bounds = array<i64: 50, 224>}, {pipeline_mode = #tpu.pipeline_mode<synchronous>, transform_indices = @transform_3, window_bounds = array<i64: 50, 1>}, {pipeline_mode = #tpu.pipeline_mode<synchronous>, transform_indices = @transform_4, window_bounds = array<i64: 50, 1>}, {pipeline_mode = #tpu.pipeline_mode<synchronous>, transform_indices = @transform_5, window_bounds = array<i64: 1, 1>}, {transform_indices = @transform_6, window_bounds = array<i64: 1, 128>}]} {
    %c0 = arith.constant 0 : index
    %c0_0 = arith.constant 0 : index
    %0 = vector.load %arg1[%c0, %c0_0] : memref<28x128xf32, #tpu.memory_space<vmem>>, vector<28x128xf32>
    %c0_1 = arith.constant 0 : index
    %c0_2 = arith.constant 0 : index
    %1 = vector.load %arg2[%c0_1, %c0_2] : memref<448x28xf32, #tpu.memory_space<vmem>>, vector<448x28xf32>
    %cst = arith.constant dense<0.000000e+00> : vector<448x128xf32>
    %2 = tpu.matmul %1, %0, %cst {dimension_numbers = #tpu.dot_dimension_numbers<[1], [0], [0], [1], [0, 0, 1, 1], [], []>} : vector<448x28xf32>, vector<28x128xf32>, vector<448x128xf32> -> vector<448x128xf32>
    %3 = vector.extract_strided_slice %2 {offsets = [0, 0], sizes = [224, 128], strides = [1, 1]} : vector<448x128xf32> to vector<224x128xf32>
    %4 = vector.extract_strided_slice %2 {offsets = [224, 0], sizes = [224, 128], strides = [1, 1]} : vector<448x128xf32> to vector<224x128xf32>
    %5 = arith.maximumf %3, %4 : vector<224x128xf32>
    %c0_3 = arith.constant 0 : index
    %c0_4 = arith.constant 0 : index
    %6 = vector.load %arg3[%c0_3, %c0_4] : memref<50x224xf32, #tpu.memory_space<vmem>>, vector<50x224xf32>
    %cst_5 = arith.constant dense<0.000000e+00> : vector<50x128xf32>
    %7 = tpu.matmul %6, %5, %cst_5 {dimension_numbers = #tpu.dot_dimension_numbers<[1], [0], [0], [1], [0, 0, 1, 1], [], []>} : vector<50x224xf32>, vector<224x128xf32>, vector<50x128xf32> -> vector<50x128xf32>
    %c0_6 = arith.constant 0 : index
    %c0_7 = arith.constant 0 : index
    %8 = vector.load %arg4[%c0_6, %c0_7] : memref<50x1xf32, #tpu.memory_space<vmem>>, vector<50x1xf32>
    %9 = vector.broadcast %8 : vector<50x1xf32> to vector<50x128xf32>
    %10 = arith.addf %7, %9 : vector<50x128xf32>
    %cst_8 = arith.constant 0.000000e+00 : f32
    %11 = vector.broadcast %cst_8 : f32 to vector<50x128xf32>
    %12 = arith.maximumf %10, %11 : vector<50x128xf32>
    %c0_9 = arith.constant 0 : index
    %c0_10 = arith.constant 0 : index
    %13 = vector.load %arg5[%c0_9, %c0_10] : memref<50x1xf32, #tpu.memory_space<vmem>>, vector<50x1xf32>
    %14 = vector.broadcast %13 : vector<50x1xf32> to vector<50x128xf32>
    %15 = arith.mulf %12, %14 : vector<50x128xf32>
    %cst_11 = arith.constant dense<0.000000e+00> : vector<128xf32>
    %16 = vector.multi_reduction <add>, %15, %cst_11 [0] : vector<50x128xf32> to vector<128xf32>
    %17 = vector.shape_cast %16 : vector<128xf32> to vector<1x128xf32>
    %c0_12 = arith.constant 0 : index
    %c0_13 = arith.constant 0 : index
    %18 = vector.load %arg6[%c0_12, %c0_13] : memref<1x1xf32, #tpu.memory_space<vmem>>, vector<1x1xf32>
    %19 = vector.broadcast %18 : vector<1x1xf32> to vector<1x128xf32>
    %20 = arith.addf %17, %19 : vector<1x128xf32>
    %c0_14 = arith.constant 0 : index
    %c0_15 = arith.constant 0 : index
    %21 = vector.load %arg7[%c0_14, %c0_15] : memref<1x128xf32, #tpu.memory_space<vmem>>, vector<1x128xf32>
    tpu.vector_store %arg7[%c0_14, %c0_15], %20 {strides = array<i32>} : memref<1x128xf32, #tpu.memory_space<vmem>>, vector<1x128xf32>,
    return
  }
  func.func @transform_0(%arg0: i32) -> (i32, i32) {
    %c0_i32 = arith.constant 0 : i32
    %c0_i32_0 = arith.constant 0 : i32
    return %c0_i32, %arg0 : i32, i32
  }
  func.func @transform_1(%arg0: i32) -> (i32, i32) {
    %c0_i32 = arith.constant 0 : i32
    %c0_i32_0 = arith.constant 0 : i32
    %c0_i32_1 = arith.constant 0 : i32
    return %c0_i32, %c0_i32_0 : i32, i32
  }
  func.func @transform_2(%arg0: i32) -> (i32, i32) {
    %c0_i32 = arith.constant 0 : i32
    %c0_i32_0 = arith.constant 0 : i32
    %c0_i32_1 = arith.constant 0 : i32
    return %c0_i32, %c0_i32_0 : i32, i32
  }
  func.func @transform_3(%arg0: i32) -> (i32, i32) {
    %c0_i32 = arith.constant 0 : i32
    %c0_i32_0 = arith.constant 0 : i32
    %c0_i32_1 = arith.constant 0 : i32
    return %c0_i32, %c0_i32_0 : i32, i32
  }
  func.func @transform_4(%arg0: i32) -> (i32, i32) {
    %c0_i32 = arith.constant 0 : i32
    %c0_i32_0 = arith.constant 0 : i32
    %c0_i32_1 = arith.constant 0 : i32
    return %c0_i32, %c0_i32_0 : i32, i32
  }
  func.func @transform_5(%arg0: i32) -> (i32, i32) {
    %c0_i32 = arith.constant 0 : i32
    %c0_i32_0 = arith.constant 0 : i32
    %c0_i32_1 = arith.constant 0 : i32
    return %c0_i32, %c0_i32_0 : i32, i32
  }
  func.func @transform_6(%arg0: i32) -> (i32, i32) {
    %c0_i32 = arith.constant 0 : i32
    %c0_i32_0 = arith.constant 0 : i32
    return %c0_i32, %arg0 : i32, i32
  }
}

</mosaic_0001>

<llo_original>
// kernel: cnn_forward.1
$region0: #{cnn_forward.1}
  #allocation0 [shape = 'u32[]', space=smem, size = 0x4, offset = 0x4, fixed_abs, tag = 'smem constant byte address 0x4 - core index']
  #allocation1 [shape = 'u32[144,128]{1,0:T(1,128)}', space=vmem, size = 0x12000, scoped, tag = 'internal scratch']
  #allocation2 [shape = 'f32[1,1]{1,0:T(1,128)S(1)}', space=vmem, size = 0x200, scoped, tag = 'scoped memory for cnn_forward.1']
  %s0 = inlined_call_operand.vmem [shape: f32[28,256], index: 0, kind: input, shape index: {}]
  %s1 = inlined_call_operand.vmem [shape: f32[448,28], index: 1, kind: input, shape index: {}]
  %s2 = inlined_call_operand.vmem [shape: f32[50,224], index: 2, kind: input, shape index: {}]
  %s3 = inlined_call_operand.vmem [shape: f32[50,1], index: 3, kind: input, shape index: {}]
  %s4 = inlined_call_operand.vmem [shape: f32[50,1], index: 4, kind: input, shape index: {}]
  %s5 = inlined_call_operand.<no memory space> [shape: f32[1,1], index: 5, kind: input, shape index: {}]
  %s6 = inlined_call_operand.vmem [shape: f32[1,256], index: 6, kind: output, shape index: {}]
  %s7 = sld [smem:[#allocation0]]
  $region95: #{cnn_forward.1} parent=0
    _
  %s9 = ssub.s32 1, %s7
  %s10 = scalar_select 0, %s9, %s7
  %v11 = vstv %s5
  %12 = vst [vmem:[#allocation2] sm:$0x1] %v11
  $region1: #{cnn_forward.1} parent=0
    #allocation3 [shape = 'u8[32768]{0}', space=vmem, size = 0x8000, scoped, tag = 'input window, operand 0']
    loop: start=0, step=1, limit=4
    $region2: #{cnn_forward.1} parent=1 // loop_pre_header
      _
    $region3: #{cnn_forward.1} parent=1 // loop_header
      %s14 = sphi 0, %s18
      %p15 = scmp.ge.s32.totalorder %s14, 4
      %s24 = sphi 0, %s26
      %s27 = sphi 0, %s24
      %s28 = sphi 0, %s27
      %s44 = sphi 0, %s28
      %s48 = sphi 0, %s48
      %s50 = sphi 0, %s48
      %s51 = sphi 0, %s50
      %s65 = sphi 0, %s51
      %s69 = sphi 0, %s69
      %s71 = sphi 0, %s69
      %s72 = sphi 0, %s71
      %s86 = sphi 0, %s72
      %s90 = sphi 0, %s90
      %s92 = sphi 0, %s90
      %s93 = sphi 0, %s92
      %s107 = sphi 0, %s93
      %s111 = sphi 0, %s111
      %s113 = sphi 0, %s111
      %s114 = sphi 0, %s113
      %s128 = sphi 0, %s114
      %s132 = sphi 0, %s132
      %s134 = sphi 0, %s132
      %s135 = sphi 0, %s134
      %s149 = sphi 0, %s135
      %s155 = sphi 0, %s157
      %s158 = sphi 0, %s155
      %s159 = sphi 0, %s158
      %s175 = sphi 0, %s159
    $region4: #{cnn_forward.1} parent=1 // loop_header_branch
      %17 = sbr.rel (%p15) target = $region8
    $region5: #{cnn_forward.1} parent=1 // loop_body
      %s19 = ssub.s32 %s14, 1
      %s20 = ssub.s32 %s14, 2
      %s21 = sadd.s32 %s14, 1
      %s22 = ssub.s32 %s14, %s21
      %p23 = scmp.eq.s32.totalorder %s22, 0
      %s25 = sadd.s32 %s24, 1
      %s26 = scalar_select %p23, %s24, %s25
      %p29 = pneg %p23
      %p30 = scmp.eq.s32.totalorder %s14, 1
      %p31 = por %p29, %p30
      %p32 = scmp.ne.s32.totalorder %s24, %s27
      %p33 = scmp.eq.s32.totalorder %s14, 0
      %p34 = por %p32, %p33
      %p35 = scmp.ne.s32.totalorder %s24, %s27
      %p36 = scmp.eq.s32.totalorder %s19, 1
      %p37 = por %p35, %p36
      %p38 = scmp.ne.s32.totalorder %s27, %s28
      %p39 = scmp.eq.s32.totalorder %s19, 0
      %p40 = por %p38, %p39
      %p41 = scmp.ne.s32.totalorder %s27, %s28
      %p42 = scmp.eq.s32.totalorder %s20, 1
      %p43 = por %p41, %p42
      %p45 = scmp.ne.s32.totalorder %s28, %s44
      %p46 = scmp.eq.s32.totalorder %s20, 0
      %p47 = por %p45, %p46
      %s49 = sadd.s32 %s48, 1
      %p52 = scmp.eq.s32.totalorder %s14, 1
      %p53 = scmp.ne.s32.totalorder %s48, %s50
      %p54 = scmp.eq.s32.totalorder %s14, 0
      %p55 = por %p53, %p54
      %p56 = scmp.ne.s32.totalorder %s48, %s50
      %p57 = scmp.eq.s32.totalorder %s19, 1
      %p58 = por %p56, %p57
      %p59 = scmp.ne.s32.totalorder %s50, %s51
      %p60 = scmp.eq.s32.totalorder %s19, 0
      %p61 = por %p59, %p60
      %p62 = scmp.ne.s32.totalorder %s50, %s51
      %p63 = scmp.eq.s32.totalorder %s20, 1
      %p64 = por %p62, %p63
      %p66 = scmp.ne.s32.totalorder %s51, %s65
      %p67 = scmp.eq.s32.totalorder %s20, 0
      %p68 = por %p66, %p67
      %s70 = sadd.s32 %s69, 1
      %p73 = scmp.eq.s32.totalorder %s14, 1
      %p74 = scmp.ne.s32.totalorder %s69, %s71
      %p75 = scmp.eq.s32.totalorder %s14, 0
      %p76 = por %p74, %p75
      %p77 = scmp.ne.s32.totalorder %s69, %s71
      %p78 = scmp.eq.s32.totalorder %s19, 1
      %p79 = por %p77, %p78
      %p80 = scmp.ne.s32.totalorder %s71, %s72
      %p81 = scmp.eq.s32.totalorder %s19, 0
      %p82 = por %p80, %p81
      %p83 = scmp.ne.s32.totalorder %s71, %s72
      %p84 = scmp.eq.s32.totalorder %s20, 1
      %p85 = por %p83, %p84
      %p87 = scmp.ne.s32.totalorder %s72, %s86
      %p88 = scmp.eq.s32.totalorder %s20, 0
      %p89 = por %p87, %p88
      %s91 = sadd.s32 %s90, 1
      %p94 = scmp.eq.s32.totalorder %s14, 1
      %p95 = scmp.ne.s32.totalorder %s90, %s92
      %p96 = scmp.eq.s32.totalorder %s14, 0
      %p97 = por %p95, %p96
      %p98 = scmp.ne.s32.totalorder %s90, %s92
      %p99 = scmp.eq.s32.totalorder %s19, 1
      %p100 = por %p98, %p99
      %p101 = scmp.ne.s32.totalorder %s92, %s93
      %p102 = scmp.eq.s32.totalorder %s19, 0
      %p103 = por %p101, %p102
      %p104 = scmp.ne.s32.totalorder %s92, %s93
      %p105 = scmp.eq.s32.totalorder %s20, 1
      %p106 = por %p104, %p105
      %p108 = scmp.ne.s32.totalorder %s93, %s107
      %p109 = scmp.eq.s32.totalorder %s20, 0
      %p110 = por %p108, %p109
      %s112 = sadd.s32 %s111, 1
      %p115 = scmp.eq.s32.totalorder %s14, 1
      %p116 = scmp.ne.s32.totalorder %s111, %s113
      %p117 = scmp.eq.s32.totalorder %s14, 0
      %p118 = por %p116, %p117
      %p119 = scmp.ne.s32.totalorder %s111, %s113
      %p120 = scmp.eq.s32.totalorder %s19, 1
      %p121 = por %p119, %p120
      %p122 = scmp.ne.s32.totalorder %s113, %s114
      %p123 = scmp.eq.s32.totalorder %s19, 0
      %p124 = por %p122, %p123
      %p125 = scmp.ne.s32.totalorder %s113, %s114
      %p126 = scmp.eq.s32.totalorder %s20, 1
      %p127 = por %p125, %p126
      %p129 = scmp.ne.s32.totalorder %s114, %s128
      %p130 = scmp.eq.s32.totalorder %s20, 0
      %p131 = por %p129, %p130
      %s133 = sadd.s32 %s132, 1
      %p136 = scmp.eq.s32.totalorder %s14, 1
      %p137 = scmp.ne.s32.totalorder %s132, %s134
      %p138 = scmp.eq.s32.totalorder %s14, 0
      %p139 = por %p137, %p138
      %p140 = scmp.ne.s32.totalorder %s132, %s134
      %p141 = scmp.eq.s32.totalorder %s19, 1
      %p142 = por %p140, %p141
      %p143 = scmp.ne.s32.totalorder %s134, %s135
      %p144 = scmp.eq.s32.totalorder %s19, 0
      %p145 = por %p143, %p144
      %p146 = scmp.ne.s32.totalorder %s134, %s135
      %p147 = scmp.eq.s32.totalorder %s20, 1
      %p148 = por %p146, %p147
      %p150 = scmp.ne.s32.totalorder %s135, %s149
      %p151 = scmp.eq.s32.totalorder %s20, 0
      %p152 = por %p150, %p151
      %s153 = ssub.s32 %s14, %s21
      %p154 = scmp.eq.s32.totalorder %s153, 0
      %s156 = sadd.s32 %s155, 1
      %s157 = scalar_select %p154, %s155, %s156
      %p160 = pneg %p154
      %p161 = scmp.eq.s32.totalorder %s14, 1
      %p162 = por %p160, %p161
      %p163 = scmp.ne.s32.totalorder %s155, %s158
      %p164 = scmp.eq.s32.totalorder %s14, 0
      %p165 = por %p163, %p164
      %p166 = scmp.ne.s32.totalorder %s155, %s158
      %p167 = scmp.eq.s32.totalorder %s19, 1
      %p168 = por %p166, %p167
      %p169 = scmp.ne.s32.totalorder %s158, %s159
      %p170 = scmp.eq.s32.totalorder %s19, 0
      %p171 = por %p169, %p170
      %p172 = scmp.ne.s32.totalorder %s158, %s159
      %p173 = scmp.eq.s32.totalorder %s20, 1
      %p174 = por %p172, %p173
      %p176 = scmp.ne.s32.totalorder %s159, %s175
      %p177 = scmp.eq.s32.totalorder %s20, 0
      %p178 = por %p176, %p177
      %p179 = scmp.le.s32.totalorder 1, %s14
      %p180 = scmp.lt.s32.totalorder %s14, 3
      %p181 = pnand %p179, %p180
      %p182 = pneg %p181
      // Predicated region
      $region9: #{cnn_forward.1} parent=5 // pred_check
        _
      $region10: #{cnn_forward.1} parent=5 // pred_check_branch
        %184 = sbr.rel (%p181) target = $region12
      $region11: #{cnn_forward.1} parent=5 // pred_region
        %s185 = ssub.s32 %s14, 1
        // Predicated region
        $region13: #{cnn_forward.1} parent=11 // pred_check
          %p186 = pneg %p61
        $region14: #{cnn_forward.1} parent=11 // pred_check_branch
          %188 = sbr.rel (%p186) target = $region16
        $region15: #{cnn_forward.1} parent=11 // pred_region
          _
        $region16: #{cnn_forward.1} parent=11 // pred_fallthru
          _
        // Predicated region
        $region17: #{cnn_forward.1} parent=11 // pred_check
          %p189 = pneg %p82
        $region18: #{cnn_forward.1} parent=11 // pred_check_branch
          %191 = sbr.rel (%p189) target = $region20
        $region19: #{cnn_forward.1} parent=11 // pred_region
          _
        $region20: #{cnn_forward.1} parent=11 // pred_fallthru
          _
        // Predicated region
        $region21: #{cnn_forward.1} parent=11 // pred_check
          %p192 = pneg %p103
        $region22: #{cnn_forward.1} parent=11 // pred_check_branch
          %194 = sbr.rel (%p192) target = $region24
        $region23: #{cnn_forward.1} parent=11 // pred_region
          _
        $region24: #{cnn_forward.1} parent=11 // pred_fallthru
          _
        // Predicated region
        $region25: #{cnn_forward.1} parent=11 // pred_check
          %p195 = pneg %p124
        $region26: #{cnn_forward.1} parent=11 // pred_check_branch
          %197 = sbr.rel (%p195) target = $region28
        $region27: #{cnn_forward.1} parent=11 // pred_region
          _
        $region28: #{cnn_forward.1} parent=11 // pred_fallthru
          _
        // Predicated region
        $region29: #{cnn_forward.1} parent=11 // pred_check
          %p198 = pneg %p145
        $region30: #{cnn_forward.1} parent=11 // pred_check_branch
          %200 = sbr.rel (%p198) target = $region32
        $region31: #{cnn_forward.1} parent=11 // pred_region
          _
        $region32: #{cnn_forward.1} parent=11 // pred_fallthru
          _
      $region12: #{cnn_forward.1} parent=5 // pred_fallthru
        _
      %p201 = scmp.lt.s32.totalorder %s14, 2
      // Predicated region
      $region33: #{cnn_forward.1} parent=5 // pred_check
        %p202 = pneg %p201
      $region34: #{cnn_forward.1} parent=5 // pred_check_branch
        %204 = sbr.rel (%p202) target = $region36
      $region35: #{cnn_forward.1} parent=5 // pred_region
        // Predicated region
        $region37: #{cnn_forward.1} parent=35 // pred_check
          %p205 = pneg %p34
        $region38: #{cnn_forward.1} parent=35 // pred_check_branch
          %207 = sbr.rel (%p205) target = $region40
        $region39: #{cnn_forward.1} parent=35 // pred_region
          %s208 = sand.u32 %s24, 1
          %s209 = sand.u32 %s24, 1
          %s210 = smul.addr %s209, 32
          %s211 = scalar_lea.vmem [#allocation3], %s210
          %s212 = smul.addr %s14, 8
          %s213 = scalar_lea.vmem %s0, %s212
          // Predicated region
          $region41: #{cnn_forward.1} parent=39 // pred_check
            _
          $region42: #{cnn_forward.1} parent=39 // pred_check_branch
            %215 = sbr.rel (0) target = $region44
          $region43: #{cnn_forward.1} parent=39 // pred_region
            // Predicated region
            $region45: #{cnn_forward.1} parent=43 // pred_check
              _
            $region46: #{cnn_forward.1} parent=43 // pred_check_branch
              %217 = sbr.rel (0) target = $region48
            $region47: #{cnn_forward.1} parent=43 // pred_region
              // Predicated region
              $region60: #{cnn_forward.1} parent=47 // pred_check
                _
              $region61: #{cnn_forward.1} parent=47 // pred_check_branch
                %238 = sbr.rel (0) target = $region63
              $region62: #{cnn_forward.1} parent=47 // pred_region
                loop: start=0, step=1, limit=1
                $region64: #{cnn_forward.1} parent=62 // loop_pre_header
                  _
                $region65: #{cnn_forward.1} parent=62 // loop_header
                  %s240 = sphi 0, %s244
                  %p241 = scmp.ge.s32.totalorder %s240, 1
                  %s245 = sphi %s213, %s213
                  %s246 = sphi %s211, %s211
                $region66: #{cnn_forward.1} parent=62 // loop_header_branch
                  %243 = sbr.rel (%p241) target = $region70
                $region67: #{cnn_forward.1} parent=62 // loop_body
                  %v247 = vld [vmem:[%s245] sm:$0xff]
                  %248 = vst [vmem:[%s246] sm:$0xff] %v247
                  %v249 = vld [vmem:[%s245 + $0x10] sm:$0xff]
                  %250 = vst [vmem:[%s246 + $0x8] sm:$0xff] %v249
                  %v251 = vld [vmem:[%s245 + $0x20] sm:$0xff]
                  %252 = vst [vmem:[%s246 + $0x10] sm:$0xff] %v251
                  %v253 = vld [vmem:[%s245 + $0x30] sm:$0xff]
                  %254 = vst [vmem:[%s246 + $0x18] sm:$0xff] %v253
                $region68: #{cnn_forward.1} parent=62 // loop_footer
                  %s244 = sadd.s32 1, %s240
                $region69: #{cnn_forward.1} parent=62 // loop_footer_branch
                  %239 = sbr.rel target = $region65
                $region70: #{cnn_forward.1} parent=62 // loop_exit
                  _
              $region63: #{cnn_forward.1} parent=47 // pred_fallthru
                _
              // Predicated region
              $region71: #{cnn_forward.1} parent=47 // pred_check
                _
              $region72: #{cnn_forward.1} parent=47 // pred_check_branch
                %256 = sbr.rel target = $region74
              $region73: #{cnn_forward.1} parent=47 // pred_region
                _
              $region74: #{cnn_forward.1} parent=47 // pred_fallthru
                _
            $region48: #{cnn_forward.1} parent=43 // pred_fallthru
              _
            // Predicated region
            $region49: #{cnn_forward.1} parent=43 // pred_check
              _
            $region50: #{cnn_forward.1} parent=43 // pred_check_branch
              %219 = sbr.rel target = $region52
            $region51: #{cnn_forward.1} parent=43 // pred_region
              loop: start=0, step=1, limit=1
              $region53: #{cnn_forward.1} parent=51 // loop_pre_header
                _
              $region54: #{cnn_forward.1} parent=51 // loop_header
                %s222 = sphi 0, %s226
                %p223 = scmp.ge.s32.totalorder %s222, 1
                %s227 = sphi %s213, %s213
                %s228 = sphi %s211, %s211
              $region55: #{cnn_forward.1} parent=51 // loop_header_branch
                %225 = sbr.rel (%p223) target = $region59
              $region56: #{cnn_forward.1} parent=51 // loop_body
                %v229 = vld [vmem:[%s227] sm:$0xff]
                %230 = vst [vmem:[%s228] sm:$0xff] %v229
                %v231 = vld [vmem:[%s227 + $0x10] sm:$0xff]
                %232 = vst [vmem:[%s228 + $0x8] sm:$0xff] %v231
                %v233 = vld [vmem:[%s227 + $0x20] sm:$0xff]
                %234 = vst [vmem:[%s228 + $0x10] sm:$0xff] %v233
                %v235 = vld [vmem:[%s227 + $0x30] sm:$0xff]
                %236 = vst [vmem:[%s228 + $0x18] sm:$0xff] %v235
              $region57: #{cnn_forward.1} parent=51 // loop_footer
                %s226 = sadd.s32 1, %s222
              $region58: #{cnn_forward.1} parent=51 // loop_footer_branch
                %221 = sbr.rel target = $region54
              $region59: #{cnn_forward.1} parent=51 // loop_exit
                _
            $region52: #{cnn_forward.1} parent=43 // pred_fallthru
              _
          $region44: #{cnn_forward.1} parent=39 // pred_fallthru
            _
          %257 = vnop
        $region40: #{cnn_forward.1} parent=35 // pred_fallthru
          _
      $region36: #{cnn_forward.1} parent=5 // pred_fallthru
        _
      %p258 = scmp.le.s32.totalorder 1, %s14
      %p259 = scmp.lt.s32.totalorder %s14, 3
      %p260 = pnand %p258, %p259
      %p261 = pneg %p260
      // Predicated region
      $region75: #{cnn_forward.1} parent=5 // pred_check
        _
      $region76: #{cnn_forward.1} parent=5 // pred_check_branch
        %263 = sbr.rel (%p260) target = $region78
      $region77: #{cnn_forward.1} parent=5 // pred_region
        %s264 = ssub.s32 %s14, 1
        %s265 = sand.u32 %s27, 1
        %s266 = sand.u32 %s27, 1
        %s267 = smul.addr %s266, 32
        %s268 = scalar_lea.vmem [#allocation3], %s267
        // Predicated region
        $region79: #{cnn_forward.1} parent=77 // pred_check
          %p269 = pneg %p40
        $region80: #{cnn_forward.1} parent=77 // pred_check_branch
          %271 = sbr.rel (%p269) target = $region82
        $region81: #{cnn_forward.1} parent=77 // pred_region
          _
        $region82: #{cnn_forward.1} parent=77 // pred_fallthru
          _
        %s272 = sand.u32 %s27, 1
        %s273 = sand.u32 %s27, 1
        %s274 = smul.addr %s273, 32
        %s275 = scalar_lea.vmem [#allocation3], %s274
        %p276 = pneg %p40
        %p277 = pneg %p37
        %p278 = pneg %p61
        %p279 = pneg %p58
        %p280 = pneg %p82
        %p281 = pneg %p79
        %p282 = pneg %p103
        %p283 = pneg %p100
        %p284 = pneg %p124
        %p285 = pneg %p121
        %p286 = pneg %p145
        %p287 = pneg %p142
        %p288 = pneg %p171
        %p289 = pneg %p168
        %p290 = scmp.lt.s32.totalorder %s19, 1
        %s291 = scalar_select %p290, %s19, 1
        %s292 = scalar_lea.vmem %s6, %s291
        %p293 = scmp.lt.s32.totalorder %s19, 1
        %s294 = scalar_select %p293, %s19, 1
        %s295 = scalar_lea.vmem %s6, %s294
        %v296 = vld [vmem:[%s268] sm:$0xff]
        %v297 = vld [vmem:[%s268 + $0x8] sm:$0xff]
        %v298 = vld [vmem:[%s268 + $0x10] sm:$0xff]
        %v299 = vld [vmem:[%s268 + $0x18] sm:$0xf]
        %v300 = vld [vmem:[%s1] sm:$0xff]
        %v301 = vld [vmem:[%s1 + $0x8] sm:$0xff]
        %v302 = vld [vmem:[%s1 + $0x10] sm:$0xff]
        %v303 = vld [vmem:[%s1 + $0x18] sm:$0xff]
        %v304 = vld [vmem:[%s1 + $0x20] sm:$0xff]
        %v305 = vld [vmem:[%s1 + $0x28] sm:$0xff]
        %v306 = vld [vmem:[%s1 + $0x30] sm:$0xff]
        %v307 = vld [vmem:[%s1 + $0x38] sm:$0xff]
        %v308 = vld [vmem:[%s1 + $0x40] sm:$0xff]
        %v309 = vld [vmem:[%s1 + $0x48] sm:$0xff]
        %v310 = vld [vmem:[%s1 + $0x50] sm:$0xff]
        %v311 = vld [vmem:[%s1 + $0x58] sm:$0xff]
        %v312 = vld [vmem:[%s1 + $0x60] sm:$0xff]
        %v313 = vld [vmem:[%s1 + $0x68] sm:$0xff]
        %v314 = vld [vmem:[%s1 + $0x70] sm:$0xff]
        %v315 = vld [vmem:[%s1 + $0x78] sm:$0xff]
        %v316 = vld [vmem:[%s1 + $0x80] sm:$0xff]
        %v317 = vld [vmem:[%s1 + $0x88] sm:$0xff]
        %v318 = vld [vmem:[%s1 + $0x90] sm:$0xff]
        %v319 = vld [vmem:[%s1 + $0x98] sm:$0xff]
        %v320 = vld [vmem:[%s1 + $0xa0] sm:$0xff]
        %v321 = vld [vmem:[%s1 + $0xa8] sm:$0xff]
        %v322 = vld [vmem:[%s1 + $0xb0] sm:$0xff]
        %v323 = vld [vmem:[%s1 + $0xb8] sm:$0xff]
        %v324 = vld [vmem:[%s1 + $0xc0] sm:$0xff]
        %v325 = vld [vmem:[%s1 + $0xc8] sm:$0xff]
        %v326 = vld [vmem:[%s1 + $0xd0] sm:$0xff]
        %v327 = vld [vmem:[%s1 + $0xd8] sm:$0xff]
        %v328 = vld [vmem:[%s1 + $0xe0] sm:$0xff]
        %v329 = vld [vmem:[%s1 + $0xe8] sm:$0xff]
        %v330 = vld [vmem:[%s1 + $0xf0] sm:$0xff]
        %v331 = vld [vmem:[%s1 + $0xf8] sm:$0xff]
        %v332 = vld [vmem:[%s1 + $0x100] sm:$0xff]
        %v333 = vld [vmem:[%s1 + $0x108] sm:$0xff]
        %v334 = vld [vmem:[%s1 + $0x110] sm:$0xff]
        %v335 = vld [vmem:[%s1 + $0x118] sm:$0xff]
        %v336 = vld [vmem:[%s1 + $0x120] sm:$0xff]
        %v337 = vld [vmem:[%s1 + $0x128] sm:$0xff]
        %v338 = vld [vmem:[%s1 + $0x130] sm:$0xff]
        %v339 = vld [vmem:[%s1 + $0x138] sm:$0xff]
        %v340 = vld [vmem:[%s1 + $0x140] sm:$0xff]
        %v341 = vld [vmem:[%s1 + $0x148] sm:$0xff]
        %v342 = vld [vmem:[%s1 + $0x150] sm:$0xff]
        %v343 = vld [vmem:[%s1 + $0x158] sm:$0xff]
        %v344 = vld [vmem:[%s1 + $0x160] sm:$0xff]
        %v345 = vld [vmem:[%s1 + $0x168] sm:$0xff]
        %v346 = vld [vmem:[%s1 + $0x170] sm:$0xff]
        %v347 = vld [vmem:[%s1 + $0x178] sm:$0xff]
        %v348 = vld [vmem:[%s1 + $0x180] sm:$0xff]
        %v349 = vld [vmem:[%s1 + $0x188] sm:$0xff]
        %v350 = vld [vmem:[%s1 + $0x190] sm:$0xff]
        %v351 = vld [vmem:[%s1 + $0x198] sm:$0xff]
        %v352 = vld [vmem:[%s1 + $0x1a0] sm:$0xff]
        %v353 = vld [vmem:[%s1 + $0x1a8] sm:$0xff]
        %v354 = vld [vmem:[%s1 + $0x1b0] sm:$0xff]
        %v355 = vld [vmem:[%s1 + $0x1b8] sm:$0xff]
        %vm356 = vcmask 228352
        %v358 = vsel %vm356, %v300, 0
        %v361 = vsel %vm356, %v301, 0
        %v364 = vsel %vm356, %v302, 0
        %v367 = vsel %vm356, %v303, 0
        %v370 = vsel %vm356, %v304, 0
        %v373 = vsel %vm356, %v305, 0
        %v376 = vsel %vm356, %v306, 0
        %v379 = vsel %vm356, %v307, 0
        %v382 = vsel %vm356, %v308, 0
        %v385 = vsel %vm356, %v309, 0
        %v388 = vsel %vm356, %v310, 0
        %v391 = vsel %vm356, %v311, 0
        %v394 = vsel %vm356, %v312, 0
        %v397 = vsel %vm356, %v313, 0
        %v400 = vsel %vm356, %v314, 0
        %v403 = vsel %vm356, %v315, 0
        %v406 = vsel %vm356, %v316, 0
        %v409 = vsel %vm356, %v317, 0
        %v412 = vsel %vm356, %v318, 0
        %v415 = vsel %vm356, %v319, 0
        %v418 = vsel %vm356, %v320, 0
        %v421 = vsel %vm356, %v321, 0
        %v424 = vsel %vm356, %v322, 0
        %v427 = vsel %vm356, %v323, 0
        %v430 = vsel %vm356, %v324, 0
        %v433 = vsel %vm356, %v325, 0
        %v436 = vsel %vm356, %v326, 0
        %v439 = vsel %vm356, %v327, 0
        %v442 = vsel %vm356, %v328, 0
        %v445 = vsel %vm356, %v329, 0
        %v448 = vsel %vm356, %v330, 0
        %v451 = vsel %vm356, %v331, 0
        %v454 = vsel %vm356, %v332, 0
        %v457 = vsel %vm356, %v333, 0
        %v460 = vsel %vm356, %v334, 0
        %v463 = vsel %vm356, %v335, 0
        %v466 = vsel %vm356, %v336, 0
        %v469 = vsel %vm356, %v337, 0
        %v472 = vsel %vm356, %v338, 0
        %v475 = vsel %vm356, %v339, 0
        %v478 = vsel %vm356, %v340, 0
        %v481 = vsel %vm356, %v341, 0
        %v484 = vsel %vm356, %v342, 0
        %v487 = vsel %vm356, %v343, 0
        %v490 = vsel %vm356, %v344, 0
        %v493 = vsel %vm356, %v345, 0
        %v496 = vsel %vm356, %v346, 0
        %v499 = vsel %vm356, %v347, 0
        %v502 = vsel %vm356, %v348, 0
        %v505 = vsel %vm356, %v349, 0
        %v508 = vsel %vm356, %v350, 0
        %v511 = vsel %vm356, %v351, 0
        %v514 = vsel %vm356, %v352, 0
        %v517 = vsel %vm356, %v353, 0
        %v520 = vsel %vm356, %v354, 0
        %v523 = vsel %vm356, %v355, 0
        %vm525 = vcmask 1043456
        %v527 = vsel %vm525, %v299, 0
        %529 = vmatprep.subr.mxu0 0.0
        %530 = vmatpush1.msra.mxu0 %v296
        %531 = vmatprep.subr.mxu0 0.0
        %532 = vmatpush1.msra.mxu0 %v297
        %533 = vmatprep.subr.mxu0 0.0
        %534 = vmatpush1.msra.mxu0 %v298
        %535 = vmatprep.subr.mxu0 0.0
        %536 = vmatpush1.msra.mxu0 %v527
        %537 = vmatprep.subr.mxu0 0.0
        %538 = vmatpush1.msra.mxu0 0.0
        %539 = vmatprep.subr.mxu0 0.0
        %540 = vmatpush1.msra.mxu0 0.0
        %541 = vmatprep.subr.mxu0 0.0
        %542 = vmatpush1.msra.mxu0 0.0
        %543 = vmatprep.subr.mxu0 0.0
        %544 = vmatpush1.msra.mxu0 0.0
        %545 = vmatprep.subr.mxu0 0.0
        %546 = vmatpush1.msra.mxu0 0.0
        %547 = vmatprep.subr.mxu0 0.0
        %548 = vmatpush1.msra.mxu0 0.0
        %549 = vmatprep.subr.mxu0 0.0
        %550 = vmatpush1.msra.mxu0 0.0
        %551 = vmatprep.subr.mxu0 0.0
        %552 = vmatpush1.msra.mxu0 0.0
        %553 = vmatprep.subr.mxu0 0.0
        %554 = vmatpush1.msra.mxu0 0.0
        %555 = vmatprep.subr.mxu0 0.0
        %556 = vmatpush1.msra.mxu0 0.0
        %557 = vmatprep.subr.mxu0 0.0
        %558 = vmatpush1.msra.mxu0 0.0
        %559 = vmatprep.subr.mxu0 0.0
        %560 = vmatpush1.msra.mxu0 0.0
        %561 = vmatprep.subr.mxu0 0.0
        %562 = vmatpush1.msra.mxu0 0.0
        %563 = vmatprep.subr.mxu0 0.0
        %564 = vmatpush1.msra.mxu0 0.0
        %565 = vmatprep.subr.mxu0 0.0
        %566 = vmatpush1.msra.mxu0 0.0
        %567 = vmatprep.subr.mxu0 0.0
        %568 = vmatpush1.msra.mxu0 0.0
        %569 = vmatprep.subr.mxu0 0.0
        %570 = vmatpush1.msra.mxu0 0.0
        %571 = vmatprep.subr.mxu0 0.0
        %572 = vmatpush1.msra.mxu0 0.0
        %573 = vmatprep.subr.mxu0 0.0
        %574 = vmatpush1.msra.mxu0 0.0
        %575 = vmatprep.subr.mxu0 0.0
        %576 = vmatpush1.msra.mxu0 0.0
        %577 = vmatprep.subr.mxu0 0.0
        %578 = vmatpush1.msra.mxu0 0.0
        %579 = vmatprep.subr.mxu0 0.0
        %580 = vmatpush1.msra.mxu0 0.0
        %581 = vmatprep.subr.mxu0 0.0
        %582 = vmatpush1.msra.mxu0 0.0
        %583 = vmatprep.subr.mxu0 0.0
        %584 = vmatpush1.msra.mxu0 0.0
        %585 = vmatprep.subr.mxu0 0.0
        %586 = vmatpush1.msra.mxu0 0.0
        %587 = vmatprep.subr.mxu0 0.0
        %588 = vmatpush1.msra.mxu0 0.0
        %589 = vmatprep.subr.mxu0 0.0
        %590 = vmatpush1.msra.mxu0 0.0
        %591 = vmatprep.subr.mxu0 0.0
        %592 = vmatpush1.msra.mxu0 0.0
        %593 = vmatprep.mubr.f32.mxu0 0.0
        %594 = vmatmul.mubr.f32.gmra.mrb[0].mxu0 %v358
        %v595 = vpop.f32.mrb[0].mxu0
        %v596 = vadd.f32 0.0, %v595
        %v597 = vpop.f32.mrb[0].mxu0
        %598 = vmatprep.mubr.f32.mxu0 0.0
        %599 = vmatmul.mubr.f32.gmra.mrb[0].mxu0 %v361
        %v600 = vpop.f32.mrb[0].mxu0
        %v601 = vadd.f32 0.0, %v600
        %v602 = vpop.f32.mrb[0].mxu0
        %603 = vmatprep.mubr.f32.mxu0 0.0
        %604 = vmatmul.mubr.f32.gmra.mrb[0].mxu0 %v364
        %v605 = vpop.f32.mrb[0].mxu0
        %v606 = vadd.f32 0.0, %v605
        %v607 = vpop.f32.mrb[0].mxu0
        %608 = vmatprep.mubr.f32.mxu0 0.0
        %609 = vmatmul.mubr.f32.gmra.mrb[0].mxu0 %v367
        %v610 = vpop.f32.mrb[0].mxu0
        %v611 = vadd.f32 0.0, %v610
        %v612 = vpop.f32.mrb[0].mxu0
        %613 = vmatprep.mubr.f32.mxu0 0.0
        %614 = vmatmul.mubr.f32.gmra.mrb[0].mxu0 %v370
        %v615 = vpop.f32.mrb[0].mxu0
        %v616 = vadd.f32 0.0, %v615
        %v617 = vpop.f32.mrb[0].mxu0
        %618 = vmatprep.mubr.f32.mxu0 0.0
        %619 = vmatmul.mubr.f32.gmra.mrb[0].mxu0 %v373
        %v620 = vpop.f32.mrb[0].mxu0
        %v621 = vadd.f32 0.0, %v620
        %v622 = vpop.f32.mrb[0].mxu0
        %623 = vmatprep.mubr.f32.mxu0 0.0
        %624 = vmatmul.mubr.f32.gmra.mrb[0].mxu0 %v376
        %v625 = vpop.f32.mrb[0].mxu0
        %v626 = vadd.f32 0.0, %v625
        %v627 = vpop.f32.mrb[0].mxu0
        %628 = vmatprep.mubr.f32.mxu0 0.0
        %629 = vmatmul.mubr.f32.gmra.mrb[0].mxu0 %v379
        %v630 = vpop.f32.mrb[0].mxu0
        %v631 = vadd.f32 0.0, %v630
        %v632 = vpop.f32.mrb[0].mxu0
        %633 = vmatprep.mubr.f32.mxu0 0.0
        %634 = vmatmul.mubr.f32.gmra.mrb[0].mxu0 %v382
        %v635 = vpop.f32.mrb[0].mxu0
        %v636 = vadd.f32 0.0, %v635
        %v637 = vpop.f32.mrb[0].mxu0
        %638 = vmatprep.mubr.f32.mxu0 0.0
        %639 = vmatmul.mubr.f32.gmra.mrb[0].mxu0 %v385
        %v640 = vpop.f32.mrb[0].mxu0
        %v641 = vadd.f32 0.0, %v640
        %v642 = vpop.f32.mrb[0].mxu0
        %643 = vmatprep.mubr.f32.mxu0 0.0
        %644 = vmatmul.mubr.f32.gmra.mrb[0].mxu0 %v388
        %v645 = vpop.f32.mrb[0].mxu0
        %v646 = vadd.f32 0.0, %v645
        %v647 = vpop.f32.mrb[0].mxu0
        %648 = vmatprep.mubr.f32.mxu0 0.0
        %649 = vmatmul.mubr.f32.gmra.mrb[0].mxu0 %v391
        %v650 = vpop.f32.mrb[0].mxu0
        %v651 = vadd.f32 0.0, %v650
        %v652 = vpop.f32.mrb[0].mxu0
        %653 = vmatprep.mubr.f32.mxu0 0.0
        %654 = vmatmul.mubr.f32.gmra.mrb[0].mxu0 %v394
        %v655 = vpop.f32.mrb[0].mxu0
        %v656 = vadd.f32 0.0, %v655
        %v657 = vpop.f32.mrb[0].mxu0
        %658 = vmatprep.mubr.f32.mxu0 0.0
        %659 = vmatmul.mubr.f32.gmra.mrb[0].mxu0 %v397
        %v660 = vpop.f32.mrb[0].mxu0
        %v661 = vadd.f32 0.0, %v660
        %v662 = vpop.f32.mrb[0].mxu0
        %663 = vmatprep.mubr.f32.mxu0 0.0
        %664 = vmatmul.mubr.f32.gmra.mrb[0].mxu0 %v400
        %v665 = vpop.f32.mrb[0].mxu0
        %v666 = vadd.f32 0.0, %v665
        %v667 = vpop.f32.mrb[0].mxu0
        %668 = vmatprep.mubr.f32.mxu0 0.0
        %669 = vmatmul.mubr.f32.gmra.mrb[0].mxu0 %v403
        %v670 = vpop.f32.mrb[0].mxu0
        %v671 = vadd.f32 0.0, %v670
        %v672 = vpop.f32.mrb[0].mxu0
        %673 = vmatprep.mubr.f32.mxu0 0.0
        %674 = vmatmul.mubr.f32.gmra.mrb[0].mxu0 %v406
        %v675 = vpop.f32.mrb[0].mxu0
        %v676 = vadd.f32 0.0, %v675
        %v677 = vpop.f32.mrb[0].mxu0
        %678 = vmatprep.mubr.f32.mxu0 0.0
        %679 = vmatmul.mubr.f32.gmra.mrb[0].mxu0 %v409
        %v680 = vpop.f32.mrb[0].mxu0
        %v681 = vadd.f32 0.0, %v680
        %v682 = vpop.f32.mrb[0].mxu0
        %683 = vmatprep.mubr.f32.mxu0 0.0
        %684 = vmatmul.mubr.f32.gmra.mrb[0].mxu0 %v412
        %v685 = vpop.f32.mrb[0].mxu0
        %v686 = vadd.f32 0.0, %v685
        %v687 = vpop.f32.mrb[0].mxu0
        %688 = vmatprep.mubr.f32.mxu0 0.0
        %689 = vmatmul.mubr.f32.gmra.mrb[0].mxu0 %v415
        %v690 = vpop.f32.mrb[0].mxu0
        %v691 = vadd.f32 0.0, %v690
        %v692 = vpop.f32.mrb[0].mxu0
        %693 = vmatprep.mubr.f32.mxu0 0.0
        %694 = vmatmul.mubr.f32.gmra.mrb[0].mxu0 %v418
        %v695 = vpop.f32.mrb[0].mxu0
        %v696 = vadd.f32 0.0, %v695
        %v697 = vpop.f32.mrb[0].mxu0
        %698 = vmatprep.mubr.f32.mxu0 0.0
        %699 = vmatmul.mubr.f32.gmra.mrb[0].mxu0 %v421
        %v700 = vpop.f32.mrb[0].mxu0
        %v701 = vadd.f32 0.0, %v700
        %v702 = vpop.f32.mrb[0].mxu0
        %703 = vmatprep.mubr.f32.mxu0 0.0
        %704 = vmatmul.mubr.f32.gmra.mrb[0].mxu0 %v424
        %v705 = vpop.f32.mrb[0].mxu0
        %v706 = vadd.f32 0.0, %v705
        %v707 = vpop.f32.mrb[0].mxu0
        %708 = vmatprep.mubr.f32.mxu0 0.0
        %709 = vmatmul.mubr.f32.gmra.mrb[0].mxu0 %v427
        %v710 = vpop.f32.mrb[0].mxu0
        %v711 = vadd.f32 0.0, %v710
        %v712 = vpop.f32.mrb[0].mxu0
        %713 = vmatprep.mubr.f32.mxu0 0.0
        %714 = vmatmul.mubr.f32.gmra.mrb[0].mxu0 %v430
        %v715 = vpop.f32.mrb[0].mxu0
        %v716 = vadd.f32 0.0, %v715
        %v717 = vpop.f32.mrb[0].mxu0
        %718 = vmatprep.mubr.f32.mxu0 0.0
        %719 = vmatmul.mubr.f32.gmra.mrb[0].mxu0 %v433
        %v720 = vpop.f32.mrb[0].mxu0
        %v721 = vadd.f32 0.0, %v720
        %v722 = vpop.f32.mrb[0].mxu0
        %723 = vmatprep.mubr.f32.mxu0 0.0
        %724 = vmatmul.mubr.f32.gmra.mrb[0].mxu0 %v436
        %v725 = vpop.f32.mrb[0].mxu0
        %v726 = vadd.f32 0.0, %v725
        %v727 = vpop.f32.mrb[0].mxu0
        %728 = vmatprep.mubr.f32.mxu0 0.0
        %729 = vmatmul.mubr.f32.gmra.mrb[0].mxu0 %v439
        %v730 = vpop.f32.mrb[0].mxu0
        %v731 = vadd.f32 0.0, %v730
        %v732 = vpop.f32.mrb[0].mxu0
        %733 = vmatprep.mubr.f32.mxu0 0.0
        %734 = vmatmul.mubr.f32.gmra.mrb[0].mxu0 %v442
        %v735 = vpop.f32.mrb[0].mxu0
        %v736 = vadd.f32 0.0, %v735
        %v737 = vpop.f32.mrb[0].mxu0
        %738 = vmatprep.mubr.f32.mxu0 0.0
        %739 = vmatmul.mubr.f32.gmra.mrb[0].mxu0 %v445
        %v740 = vpop.f32.mrb[0].mxu0
        %v741 = vadd.f32 0.0, %v740
        %v742 = vpop.f32.mrb[0].mxu0
        %743 = vmatprep.mubr.f32.mxu0 0.0
        %744 = vmatmul.mubr.f32.gmra.mrb[0].mxu0 %v448
        %v745 = vpop.f32.mrb[0].mxu0
        %v746 = vadd.f32 0.0, %v745
        %v747 = vpop.f32.mrb[0].mxu0
        %748 = vmatprep.mubr.f32.mxu0 0.0
        %749 = vmatmul.mubr.f32.gmra.mrb[0].mxu0 %v451
        %v750 = vpop.f32.mrb[0].mxu0
        %v751 = vadd.f32 0.0, %v750
        %v752 = vpop.f32.mrb[0].mxu0
        %753 = vmatprep.mubr.f32.mxu0 0.0
        %754 = vmatmul.mubr.f32.gmra.mrb[0].mxu0 %v454
        %v755 = vpop.f32.mrb[0].mxu0
        %v756 = vadd.f32 0.0, %v755
        %v757 = vpop.f32.mrb[0].mxu0
        %758 = vmatprep.mubr.f32.mxu0 0.0
        %759 = vmatmul.mubr.f32.gmra.mrb[0].mxu0 %v457
        %v760 = vpop.f32.mrb[0].mxu0
        %v761 = vadd.f32 0.0, %v760
        %v762 = vpop.f32.mrb[0].mxu0
        %763 = vmatprep.mubr.f32.mxu0 0.0
        %764 = vmatmul.mubr.f32.gmra.mrb[0].mxu0 %v460
        %v765 = vpop.f32.mrb[0].mxu0
        %v766 = vadd.f32 0.0, %v765
        %v767 = vpop.f32.mrb[0].mxu0
        %768 = vmatprep.mubr.f32.mxu0 0.0
        %769 = vmatmul.mubr.f32.gmra.mrb[0].mxu0 %v463
        %v770 = vpop.f32.mrb[0].mxu0
        %v771 = vadd.f32 0.0, %v770
        %v772 = vpop.f32.mrb[0].mxu0
        %773 = vmatprep.mubr.f32.mxu0 0.0
        %774 = vmatmul.mubr.f32.gmra.mrb[0].mxu0 %v466
        %v775 = vpop.f32.mrb[0].mxu0
        %v776 = vadd.f32 0.0, %v775
        %v777 = vpop.f32.mrb[0].mxu0
        %778 = vmatprep.mubr.f32.mxu0 0.0
        %779 = vmatmul.mubr.f32.gmra.mrb[0].mxu0 %v469
        %v780 = vpop.f32.mrb[0].mxu0
        %v781 = vadd.f32 0.0, %v780
        %v782 = vpop.f32.mrb[0].mxu0
        %783 = vmatprep.mubr.f32.mxu0 0.0
        %784 = vmatmul.mubr.f32.gmra.mrb[0].mxu0 %v472
        %v785 = vpop.f32.mrb[0].mxu0
        %v786 = vadd.f32 0.0, %v785
        %v787 = vpop.f32.mrb[0].mxu0
        %788 = vmatprep.mubr.f32.mxu0 0.0
        %789 = vmatmul.mubr.f32.gmra.mrb[0].mxu0 %v475
        %v790 = vpop.f32.mrb[0].mxu0
        %v791 = vadd.f32 0.0, %v790
        %v792 = vpop.f32.mrb[0].mxu0
        %793 = vmatprep.mubr.f32.mxu0 0.0
        %794 = vmatmul.mubr.f32.gmra.mrb[0].mxu0 %v478
        %v795 = vpop.f32.mrb[0].mxu0
        %v796 = vadd.f32 0.0, %v795
        %v797 = vpop.f32.mrb[0].mxu0
        %798 = vmatprep.mubr.f32.mxu0 0.0
        %799 = vmatmul.mubr.f32.gmra.mrb[0].mxu0 %v481
        %v800 = vpop.f32.mrb[0].mxu0
        %v801 = vadd.f32 0.0, %v800
        %v802 = vpop.f32.mrb[0].mxu0
        %803 = vmatprep.mubr.f32.mxu0 0.0
        %804 = vmatmul.mubr.f32.gmra.mrb[0].mxu0 %v484
        %v805 = vpop.f32.mrb[0].mxu0
        %v806 = vadd.f32 0.0, %v805
        %v807 = vpop.f32.mrb[0].mxu0
        %808 = vmatprep.mubr.f32.mxu0 0.0
        %809 = vmatmul.mubr.f32.gmra.mrb[0].mxu0 %v487
        %v810 = vpop.f32.mrb[0].mxu0
        %v811 = vadd.f32 0.0, %v810
        %v812 = vpop.f32.mrb[0].mxu0
        %813 = vmatprep.mubr.f32.mxu0 0.0
        %814 = vmatmul.mubr.f32.gmra.mrb[0].mxu0 %v490
        %v815 = vpop.f32.mrb[0].mxu0
        %v816 = vadd.f32 0.0, %v815
        %v817 = vpop.f32.mrb[0].mxu0
        %818 = vmatprep.mubr.f32.mxu0 0.0
        %819 = vmatmul.mubr.f32.gmra.mrb[0].mxu0 %v493
        %v820 = vpop.f32.mrb[0].mxu0
        %v821 = vadd.f32 0.0, %v820
        %v822 = vpop.f32.mrb[0].mxu0
        %823 = vmatprep.mubr.f32.mxu0 0.0
        %824 = vmatmul.mubr.f32.gmra.mrb[0].mxu0 %v496
        %v825 = vpop.f32.mrb[0].mxu0
        %v826 = vadd.f32 0.0, %v825
        %v827 = vpop.f32.mrb[0].mxu0
        %828 = vmatprep.mubr.f32.mxu0 0.0
        %829 = vmatmul.mubr.f32.gmra.mrb[0].mxu0 %v499
        %v830 = vpop.f32.mrb[0].mxu0
        %v831 = vadd.f32 0.0, %v830
        %v832 = vpop.f32.mrb[0].mxu0
        %833 = vmatprep.mubr.f32.mxu0 0.0
        %834 = vmatmul.mubr.f32.gmra.mrb[0].mxu0 %v502
        %v835 = vpop.f32.mrb[0].mxu0
        %v836 = vadd.f32 0.0, %v835
        %v837 = vpop.f32.mrb[0].mxu0
        %838 = vmatprep.mubr.f32.mxu0 0.0
        %839 = vmatmul.mubr.f32.gmra.mrb[0].mxu0 %v505
        %v840 = vpop.f32.mrb[0].mxu0
        %v841 = vadd.f32 0.0, %v840
        %v842 = vpop.f32.mrb[0].mxu0
        %843 = vmatprep.mubr.f32.mxu0 0.0
        %844 = vmatmul.mubr.f32.gmra.mrb[0].mxu0 %v508
        %v845 = vpop.f32.mrb[0].mxu0
        %v846 = vadd.f32 0.0, %v845
        %v847 = vpop.f32.mrb[0].mxu0
        %848 = vmatprep.mubr.f32.mxu0 0.0
        %849 = vmatmul.mubr.f32.gmra.mrb[0].mxu0 %v511
        %v850 = vpop.f32.mrb[0].mxu0
        %v851 = vadd.f32 0.0, %v850
        %v852 = vpop.f32.mrb[0].mxu0
        %853 = vmatprep.mubr.f32.mxu0 0.0
        %854 = vmatmul.mubr.f32.gmra.mrb[0].mxu0 %v514
        %v855 = vpop.f32.mrb[0].mxu0
        %v856 = vadd.f32 0.0, %v855
        %v857 = vpop.f32.mrb[0].mxu0
        %858 = vmatprep.mubr.f32.mxu0 0.0
        %859 = vmatmul.mubr.f32.gmra.mrb[0].mxu0 %v517
        %v860 = vpop.f32.mrb[0].mxu0
        %v861 = vadd.f32 0.0, %v860
        %v862 = vpop.f32.mrb[0].mxu0
        %863 = vmatprep.mubr.f32.mxu0 0.0
        %864 = vmatmul.mubr.f32.gmra.mrb[0].mxu0 %v520
        %v865 = vpop.f32.mrb[0].mxu0
        %v866 = vadd.f32 0.0, %v865
        %v867 = vpop.f32.mrb[0].mxu0
        %868 = vmatprep.mubr.f32.mxu0 0.0
        %869 = vmatmul.mubr.f32.gmra.mrb[0].mxu0 %v523
        %v870 = vpop.f32.mrb[0].mxu0
        %v871 = vadd.f32 0.0, %v870
        %v872 = vpop.f32.mrb[0].mxu0
        %873 = vdwg.mxu0
        %v874 = vmax.f32 %v596, %v736
        %v875 = vmax.f32 %v601, %v741
        %v876 = vmax.f32 %v606, %v746
        %v877 = vmax.f32 %v611, %v751
        %v878 = vmax.f32 %v616, %v756
        %v879 = vmax.f32 %v621, %v761
        %v880 = vmax.f32 %v626, %v766
        %v881 = vmax.f32 %v631, %v771
        %v882 = vmax.f32 %v636, %v776
        %v883 = vmax.f32 %v641, %v781
        %v884 = vmax.f32 %v646, %v786
        %v885 = vmax.f32 %v651, %v791
        %v886 = vmax.f32 %v656, %v796
        %v887 = vmax.f32 %v661, %v801
        %v888 = vmax.f32 %v666, %v806
        %v889 = vmax.f32 %v671, %v811
        %v890 = vmax.f32 %v676, %v816
        %v891 = vmax.f32 %v681, %v821
        %v892 = vmax.f32 %v686, %v826
        %v893 = vmax.f32 %v691, %v831
        %v894 = vmax.f32 %v696, %v836
        %v895 = vmax.f32 %v701, %v841
        %v896 = vmax.f32 %v706, %v846
        %v897 = vmax.f32 %v711, %v851
        %v898 = vmax.f32 %v716, %v856
        %v899 = vmax.f32 %v721, %v861
        %v900 = vmax.f32 %v726, %v866
        %v901 = vmax.f32 %v731, %v871
        %v902 = vld [vmem:[%s2] sm:$0xff]
        %v903 = vld [vmem:[%s2 + $0x8] sm:$0xff]
        %v904 = vld [vmem:[%s2 + $0x10] sm:$0xff]
        %v905 = vld [vmem:[%s2 + $0x18] sm:$0xff]
        %v906 = vld [vmem:[%s2 + $0x20] sm:$0xff]
        %v907 = vld [vmem:[%s2 + $0x28] sm:$0xff]
        %v908 = vld [vmem:[%s2 + $0x30] sm:$0xff]
        %v909 = vld [vmem:[%s2 + $0x38] sm:$0xff]
        %v910 = vld [vmem:[%s2 + $0x40] sm:$0xff]
        %v911 = vld [vmem:[%s2 + $0x48] sm:$0xff]
        %v912 = vld [vmem:[%s2 + $0x50] sm:$0xff]
        %v913 = vld [vmem:[%s2 + $0x58] sm:$0xff]
        %v914 = vld [vmem:[%s2 + $0x60] sm:$0x3]
        %v915 = vld [vmem:[%s2 + $0x68] sm:$0x3]
        %v916 = vld [vmem:[%s3] sm:$0xff]
        %v917 = vld [vmem:[%s3 + $0x8] sm:$0xff]
        %v918 = vld [vmem:[%s3 + $0x10] sm:$0xff]
        %v919 = vld [vmem:[%s3 + $0x18] sm:$0xff]
        %v920 = vld [vmem:[%s3 + $0x20] sm:$0xff]
        %v921 = vld [vmem:[%s3 + $0x28] sm:$0xff]
        %v922 = vld [vmem:[%s3 + $0x30] sm:$0x3]
        %924 = vset.pattern.permute.xlu0 0
        %925 = vperm.xlu0 %924, %v916
        %v926 = vpop.permute.xlu0 %925
        %929 = vset.pattern.permute.xlu0 0
        %930 = vperm.xlu0 %929, %v917
        %v931 = vpop.permute.xlu0 %930
        %934 = vset.pattern.permute.xlu0 0
        %935 = vperm.xlu0 %934, %v918
        %v936 = vpop.permute.xlu0 %935
        %939 = vset.pattern.permute.xlu0 0
        %940 = vperm.xlu0 %939, %v919
        %v941 = vpop.permute.xlu0 %940
        %944 = vset.pattern.permute.xlu0 0
        %945 = vperm.xlu0 %944, %v920
        %v946 = vpop.permute.xlu0 %945
        %949 = vset.pattern.permute.xlu0 0
        %950 = vperm.xlu0 %949, %v921
        %v951 = vpop.permute.xlu0 %950
        %954 = vset.pattern.permute.xlu0 0
        %955 = vperm.xlu0 %954, %v922
        %v956 = vpop.permute.xlu0 %955
        %vm958 = vcmask 785408
        %v960 = vsel %vm958, %v903, 0
        %v963 = vsel %vm958, %v905, 0
        %v966 = vsel %vm958, %v907, 0
        %v969 = vsel %vm958, %v909, 0
        %v972 = vsel %vm958, %v911, 0
        %v975 = vsel %vm958, %v913, 0
        %v978 = vsel %vm958, %v915, 0
        %980 = vmatprep.subr.mxu0 0.0
        %981 = vmatpush1.msra.mxu0 %v874
        %982 = vmatprep.subr.mxu0 0.0
        %983 = vmatpush1.msra.mxu0 %v875
        %984 = vmatprep.subr.mxu0 0.0
        %985 = vmatpush1.msra.mxu0 %v876
        %986 = vmatprep.subr.mxu0 0.0
        %987 = vmatpush1.msra.mxu0 %v877
        %988 = vmatprep.subr.mxu0 0.0
        %989 = vmatpush1.msra.mxu0 %v878
        %990 = vmatprep.subr.mxu0 0.0
        %991 = vmatpush1.msra.mxu0 %v879
        %992 = vmatprep.subr.mxu0 0.0
        %993 = vmatpush1.msra.mxu0 %v880
        %994 = vmatprep.subr.mxu0 0.0
        %995 = vmatpush1.msra.mxu0 %v881
        %996 = vmatprep.subr.mxu0 0.0
        %997 = vmatpush1.msra.mxu0 %v882
        %998 = vmatprep.subr.mxu0 0.0
        %999 = vmatpush1.msra.mxu0 %v883
        %1000 = vmatprep.subr.mxu0 0.0
        %1001 = vmatpush1.msra.mxu0 %v884
        %1002 = vmatprep.subr.mxu0 0.0
        %1003 = vmatpush1.msra.mxu0 %v885
        %1004 = vmatprep.subr.mxu0 0.0
        %1005 = vmatpush1.msra.mxu0 %v886
        %1006 = vmatprep.subr.mxu0 0.0
        %1007 = vmatpush1.msra.mxu0 %v887
        %1008 = vmatprep.subr.mxu0 0.0
        %1009 = vmatpush1.msra.mxu0 %v888
        %1010 = vmatprep.subr.mxu0 0.0
        %1011 = vmatpush1.msra.mxu0 %v889
        %1012 = vmatprep.subr.mxu0 0.0
        %1013 = vmatpush1.msra.mxu0 %v890
        %1014 = vmatprep.subr.mxu0 0.0
        %1015 = vmatpush1.msra.mxu0 %v891
        %1016 = vmatprep.subr.mxu0 0.0
        %1017 = vmatpush1.msra.mxu0 %v892
        %1018 = vmatprep.subr.mxu0 0.0
        %1019 = vmatpush1.msra.mxu0 %v893
        %1020 = vmatprep.subr.mxu0 0.0
        %1021 = vmatpush1.msra.mxu0 %v894
        %1022 = vmatprep.subr.mxu0 0.0
        %1023 = vmatpush1.msra.mxu0 %v895
        %1024 = vmatprep.subr.mxu0 0.0
        %1025 = vmatpush1.msra.mxu0 %v896
        %1026 = vmatprep.subr.mxu0 0.0
        %1027 = vmatpush1.msra.mxu0 %v897
        %1028 = vmatprep.subr.mxu0 0.0
        %1029 = vmatpush1.msra.mxu0 %v898
        %1030 = vmatprep.subr.mxu0 0.0
        %1031 = vmatpush1.msra.mxu0 %v899
        %1032 = vmatprep.subr.mxu0 0.0
        %1033 = vmatpush1.msra.mxu0 %v900
        %1034 = vmatprep.subr.mxu0 0.0
        %1035 = vmatpush1.msra.mxu0 %v901
        %1036 = vmatprep.subr.mxu0 0.0
        %1037 = vmatpush1.msra.mxu0 0.0
        %1038 = vmatprep.subr.mxu0 0.0
        %1039 = vmatpush1.msra.mxu0 0.0
        %1040 = vmatprep.subr.mxu0 0.0
        %1041 = vmatpush1.msra.mxu0 0.0
        %1042 = vmatprep.subr.mxu0 0.0
        %1043 = vmatpush1.msra.mxu0 0.0
        %1044 = vmatprep.mubr.f32.mxu0 %v960
        %1045 = vmatmul.mubr.f32.gmra.mrb[0].mxu0 %v902
        %v1046 = vpop.f32.mrb[0].mxu0
        %v1047 = vadd.f32 %v926, %v1046
        %v1048 = vpop.f32.mrb[0].mxu0
        %1049 = vmatprep.mubr.f32.mxu0 %v963
        %1050 = vmatmul.mubr.f32.gmra.mrb[0].mxu0 %v904
        %v1051 = vpop.f32.mrb[0].mxu0
        %v1052 = vadd.f32 %v931, %v1051
        %v1053 = vpop.f32.mrb[0].mxu0
        %1054 = vmatprep.mubr.f32.mxu0 %v966
        %1055 = vmatmul.mubr.f32.gmra.mrb[0].mxu0 %v906
        %v1056 = vpop.f32.mrb[0].mxu0
        %v1057 = vadd.f32 %v936, %v1056
        %v1058 = vpop.f32.mrb[0].mxu0
        %1059 = vmatprep.mubr.f32.mxu0 %v969
        %1060 = vmatmul.mubr.f32.gmra.mrb[0].mxu0 %v908
        %v1061 = vpop.f32.mrb[0].mxu0
        %v1062 = vadd.f32 %v941, %v1061
        %v1063 = vpop.f32.mrb[0].mxu0
        %1064 = vmatprep.mubr.f32.mxu0 %v972
        %1065 = vmatmul.mubr.f32.gmra.mrb[0].mxu0 %v910
        %v1066 = vpop.f32.mrb[0].mxu0
        %v1067 = vadd.f32 %v946, %v1066
        %v1068 = vpop.f32.mrb[0].mxu0
        %1069 = vmatprep.mubr.f32.mxu0 %v975
        %1070 = vmatmul.mubr.f32.gmra.mrb[0].mxu0 %v912
        %v1071 = vpop.f32.mrb[0].mxu0
        %v1072 = vadd.f32 %v951, %v1071
        %v1073 = vpop.f32.mrb[0].mxu0
        %1074 = vmatprep.mubr.f32.mxu0 %v978
        %1075 = vmatmul.mubr.f32.gmra.mrb[0].mxu0 %v914
        %v1076 = vpop.f32.mrb[0].mxu0
        %v1077 = vadd.f32 %v956, %v1076
        %v1078 = vpop.f32.mrb[0].mxu0
        %1079 = vdwg.mxu0
        %v1080 = vmax.f32 %v1047, 0.0
        %v1081 = vmax.f32 %v1052, 0.0
        %v1082 = vmax.f32 %v1057, 0.0
        %v1083 = vmax.f32 %v1062, 0.0
        %v1084 = vmax.f32 %v1067, 0.0
        %v1085 = vmax.f32 %v1072, 0.0
        %v1086 = vmax.f32 %v1077, 0.0
        %v1087 = vld [vmem:[%s4] sm:$0xff]
        %v1088 = vld [vmem:[%s4 + $0x8] sm:$0xff]
        %v1089 = vld [vmem:[%s4 + $0x10] sm:$0xff]
        %v1090 = vld [vmem:[%s4 + $0x18] sm:$0xff]
        %v1091 = vld [vmem:[%s4 + $0x20] sm:$0xff]
        %v1092 = vld [vmem:[%s4 + $0x28] sm:$0xff]
        %v1093 = vld [vmem:[%s4 + $0x30] sm:$0x3]
        %1095 = vset.pattern.permute.xlu0 0
        %1096 = vperm.xlu0 %1095, %v1087
        %v1097 = vpop.permute.xlu0 %1096
        %1100 = vset.pattern.permute.xlu0 0
        %1101 = vperm.xlu0 %1100, %v1088
        %v1102 = vpop.permute.xlu0 %1101
        %1105 = vset.pattern.permute.xlu0 0
        %1106 = vperm.xlu0 %1105, %v1089
        %v1107 = vpop.permute.xlu0 %1106
        %1110 = vset.pattern.permute.xlu0 0
        %1111 = vperm.xlu0 %1110, %v1090
        %v1112 = vpop.permute.xlu0 %1111
        %1115 = vset.pattern.permute.xlu0 0
        %1116 = vperm.xlu0 %1115, %v1091
        %v1117 = vpop.permute.xlu0 %1116
        %1120 = vset.pattern.permute.xlu0 0
        %1121 = vperm.xlu0 %1120, %v1092
        %v1122 = vpop.permute.xlu0 %1121
        %1125 = vset.pattern.permute.xlu0 0
        %1126 = vperm.xlu0 %1125, %v1093
        %v1127 = vpop.permute.xlu0 %1126
        %v1129 = vmul.f32 %v1080, %v1097
        %v1130 = vmul.f32 %v1081, %v1102
        %v1131 = vmul.f32 %v1082, %v1107
        %v1132 = vmul.f32 %v1083, %v1112
        %v1133 = vmul.f32 %v1084, %v1117
        %v1134 = vmul.f32 %v1085, %v1122
        %v1135 = vmul.f32 %v1086, %v1127
        %v1136 = vadd.f32 %v1129, %v1130
        %v1137 = vadd.f32 %v1136, %v1131
        %v1138 = vadd.f32 %v1137, %v1132
        %v1139 = vadd.f32 %v1138, %v1133
        %v1140 = vadd.f32 %v1139, %v1134
        %vm1141 = vcmask 1041408
        %v1142 = vsel %vm1141, %v1135, 0.0
        %v1143 = vadd.f32 %v1140, %v1142
        %v1144 = vrot.slane %v1143, 4
        %v1145 = vadd.f32 %v1143, %v1144
        %v1146 = vrot.slane %v1145, 2
        %v1147 = vadd.f32 %v1145, %v1146
        %v1148 = vrot.slane %v1147, 1
        %v1149 = vadd.f32 %v1147, %v1148
        %v1150 = vld [vmem:[#allocation2] sm:$0x1]
        %1152 = vset.pattern.permute.xlu0 0
        %1153 = vperm.xlu0 %1152, %v1150
        %v1154 = vpop.permute.xlu0 %1153
        %v1156 = vlaneseq
        %v1157 = vshrl.u32 %v1156, 7
        %v1158 = vsub.s32 0, %v1157
        %v1159 = vrot.slane %v1154, %v1158
        %v1160 = vadd.f32 %v1149, %v1159
        %1161 = vst [vmem:[%s295] sm:$0x1] %v1160
        %p1162 = scmp.lt.s32.totalorder %s19, 1
        %s1163 = scalar_select %p1162, %s19, 1
        %s1164 = scalar_lea.vmem %s6, %s1163
        // Predicated region
        $region83: #{cnn_forward.1} parent=77 // pred_check
          %p1165 = pneg %p168
        $region84: #{cnn_forward.1} parent=77 // pred_check_branch
          %1167 = sbr.rel (%p1165) target = $region86
        $region85: #{cnn_forward.1} parent=77 // pred_region
          _
        $region86: #{cnn_forward.1} parent=77 // pred_fallthru
          _
      $region78: #{cnn_forward.1} parent=5 // pred_fallthru
        _
      %p1168 = scmp.le.s32.totalorder 2, %s14
      // Predicated region
      $region87: #{cnn_forward.1} parent=5 // pred_check
        %p1169 = pneg %p1168
      $region88: #{cnn_forward.1} parent=5 // pred_check_branch
        %1171 = sbr.rel (%p1169) target = $region90
      $region89: #{cnn_forward.1} parent=5 // pred_region
        %s1172 = ssub.s32 %s14, 2
        // Predicated region
        $region91: #{cnn_forward.1} parent=89 // pred_check
          %p1173 = pneg %p174
        $region92: #{cnn_forward.1} parent=89 // pred_check_branch
          %1175 = sbr.rel (%p1173) target = $region94
        $region93: #{cnn_forward.1} parent=89 // pred_region
          %p1176 = scmp.lt.s32.totalorder %s20, 1
          %s1177 = scalar_select %p1176, %s20, 1
          %s1178 = scalar_lea.vmem %s6, %s1177
        $region94: #{cnn_forward.1} parent=89 // pred_fallthru
          _
      $region90: #{cnn_forward.1} parent=5 // pred_fallthru
        _
    $region6: #{cnn_forward.1} parent=1 // loop_footer
      %s18 = sadd.s32 1, %s14
    $region7: #{cnn_forward.1} parent=1 // loop_footer_branch
      %13 = sbr.rel target = $region3
    $region8: #{cnn_forward.1} parent=1 // loop_exit
      _

</llo_original>
